<compile_context>
chip_gen: v5e
topology: v5e:2x2
jax: 0.10.0
libtpu: 0.0.40
codegen_flags: <defaults>
</compile_context>

<pallas_src>
import math

import jax
import jax.numpy as jnp
from jax.experimental import pallas as pl
from jax.experimental.pallas import tpu as pltpu


def _make_jam_kernel(true_L, matmul_dtype):
    """Kernel factory; true_L (pre-padding length) and matmul dtype are static."""

    def kernel(y_ref, w_ref, wt_ref, o_ref):
        # y_ref:  (Bt, C, Lp)   input block
        # w_ref:  (3, C+1, C)   fused conv weights, tap-major; row C = conv1x1
        # wt_ref: (k, 1)        ECAM channel-conv taps
        # o_ref:  (Bt, C, Lp)   output block
        Bt, C, Lp = y_ref.shape
        k = wt_ref.shape[0]
        pad = k // 2
        inv_L = jnp.float32(1.0 / true_L)

        # Hoisted out of the batch loop: lane index & boundary masks.
        col = jax.lax.broadcasted_iota(jnp.int32, (C, Lp), 1)
        first_col = col == 0
        last_col = col == Lp - 1

        def body(b, carry):
            y = y_ref[b]  # (C, Lp) f32

            # 3-tap shifts built in-register (no padded HBM copy):
            #   y_l[:, l] = y[:, l-1] (0 at l=0), y_r[:, l] = y[:, l+1] (0 at l=Lp-1)
            y_l = jnp.where(first_col, 0.0, pltpu.roll(y, shift=1, axis=1))
            y_r = jnp.where(last_col, 0.0, pltpu.roll(y, shift=Lp - 1, axis=1))

            # Fused (conv3 || conv1x1): rows 0..C-1 -> 3-tap conv, row C -> 1x1 conv.
            out_full = (
                jnp.dot(w_ref[0], y_l.astype(matmul_dtype),
                        preferred_element_type=jnp.float32)
                + jnp.dot(w_ref[1], y.astype(matmul_dtype),
                          preferred_element_type=jnp.float32)
                + jnp.dot(w_ref[2], y_r.astype(matmul_dtype),
                          preferred_element_type=jnp.float32)
            )  # (C+1, Lp) f32
            out3 = out_full[0:C]          # (C, Lp)
            f1_lin = out_full[C:C + 1]    # (1, Lp)

            f1 = 1.0 / (1.0 + jnp.exp(-f1_lin))            # sigmoid(conv1x1)
            f2 = jnp.where(out3 >= 0, out3, 0.01 * out3)   # leaky_relu(conv3), slope 0.01
            ecm = f1 * f2 + y                              # (C, Lp)

            # ECAM: global average pool over the true (unpadded) length.
            if Lp != true_L:
                ecm_gap = jnp.where(col < true_L, ecm, 0.0)
            else:
                ecm_gap = ecm
            gap = jnp.sum(ecm_gap, axis=1, keepdims=True) * inv_L   # (C, 1)

            # Channel-wise conv (kernel k, padding k//2) as k scalar taps (VPU only).
            if pad > 0:
                zp = jnp.zeros((pad, 1), jnp.float32)
                gpad = jnp.concatenate([zp, gap, zp], axis=0)       # (C + 2*pad, 1)
            else:
                gpad = gap
            atten_lin = jnp.zeros((C, 1), jnp.float32)
            for t in range(k):                                      # k is tiny (1..7)
                atten_lin = atten_lin + wt_ref[t:t + 1] * gpad[t:t + C]
            atten = 1.0 / (1.0 + jnp.exp(-atten_lin))               # (C, 1)

            o_ref[b] = ((atten + 1.0) * ecm).astype(o_ref.dtype)
            return carry

        jax.lax.fori_loop(0, Bt, body, 0, unroll=True)

    return kernel


def _choose_batch_block(B, C, Lp, budget_bytes=12 << 20):
    """Pick batches-per-grid-step: amortize step overhead, stay under VMEM,
    and keep >=2 grid steps when possible so both v7x TensorCores get work."""
    per_batch = 16 * C * Lp  # 2 (in+out) x 2 (double buffer) x C*Lp x 4 bytes
    cap = max(1, budget_bytes // per_batch)
    divisors = [d for d in range(1, B + 1) if B % d == 0 and d <= cap]
    if not divisors:
        return 1
    multi = [d for d in divisors if B // d >= 2]
    return max(multi) if multi else max(divisors)


def _ecam_kernel_size(in_c, b=1, gama=2):
    k = int(abs((math.log(in_c, 2) + b) / gama))
    if k % 2:
        return k
    return k + 1


def _ecam_band_matrix(w_ecam, C):
    # Reference-only helper: w (k,) -> banded (C, C) matrix of the channel conv.
    k = w_ecam.shape[0]
    pad = k // 2
    o_idx = jnp.arange(C)[:, None]
    c_idx = jnp.arange(C)[None, :]
    t = c_idx - o_idx + pad
    valid = (t >= 0) & (t < k)
    t_clamped = jnp.clip(t, 0, k - 1)
    return jnp.where(valid, w_ecam[t_clamped], 0.0).astype(jnp.float32)


def jam_forward(Y, w1, w3, w_ecam, *, matmul_dtype=jnp.float32):
    """JAM forward. Y: (B, C, L) f32; w1: (1, C, 1); w3: (C, C, 3); w_ecam: (k,)."""
    B, C, L = Y.shape
    k = w_ecam.shape[0]

    # Lane-dense length (padded columns are masked out of the GAP mean).
    Lp = ((L + 127) // 128) * 128
    Y_in = Y if Lp == L else jnp.pad(Y, ((0, 0), (0, 0), (0, Lp - L)))

    # Fused conv weights: tap-major (3, C+1, C); row C of the centre tap = conv1x1.
    w3_t = jnp.transpose(w3, (2, 0, 1)).astype(jnp.float32)          # (3, C, C)
    w1_row = w1.reshape(1, 1, C).astype(jnp.float32)                 # (1, 1, C)
    zeros_row = jnp.zeros((1, 1, C), jnp.float32)
    extra = jnp.concatenate([zeros_row, w1_row, zeros_row], axis=0)  # (3, 1, C)
    w_fused = jnp.concatenate([w3_t, extra], axis=1).astype(matmul_dtype)  # (3, C+1, C)
    w_taps = w_ecam.reshape(k, 1).astype(jnp.float32)                # (k, 1)

    Bt = _choose_batch_block(B, C, Lp)
    grid = (B // Bt,)

    out = pl.pallas_call(
        _make_jam_kernel(L, matmul_dtype),
        out_shape=jax.ShapeDtypeStruct((B, C, Lp), Y.dtype),
        grid_spec=pltpu.PrefetchScalarGridSpec(
            num_scalar_prefetch=0,
            grid=grid,
            in_specs=[
                pl.BlockSpec((Bt, C, Lp), lambda i: (i, 0, 0)),
                pl.BlockSpec((3, C + 1, C), lambda i: (0, 0, 0)),  # resident across steps
                pl.BlockSpec((k, 1), lambda i: (0, 0)),            # resident across steps
            ],
            out_specs=pl.BlockSpec((Bt, C, Lp), lambda i: (i, 0, 0)),
        ),
        compiler_params=pltpu.CompilerParams(
            dimension_semantics=("parallel",),
            vmem_limit_bytes=48 * 1024 * 1024,
        ),
    )(Y_in, w_fused, w_taps)

    return out if Lp == L else out[:, :, :L]


def jam_reference(Y, w1, w3, w_ecam):
    """Pure-JAX reference mirroring the PyTorch forward."""
    B, C, L = Y.shape
    f1 = jax.nn.sigmoid(jnp.einsum("oci,bcl->bol", w1, Y))          # (B,1,L)
    Yp = jnp.pad(Y, ((0, 0), (0, 0), (1, 1)))
    out3 = sum(
        jnp.einsum("oc,bcl->bol", w3[:, :, t], Yp[:, :, t:t + L]) for t in range(3)
    )
    f2 = jnp.where(out3 >= 0, out3, 0.01 * out3)
    ecm = f1 * f2 + Y
    gap = jnp.mean(ecm, axis=2, keepdims=True)                      # (B,C,1)
    M = _ecam_band_matrix(w_ecam.astype(jnp.float32), C)            # (C,C)
    atten = jax.nn.sigmoid(jnp.einsum("oc,bcx->box", M, gap))       # (B,C,1)
    return atten * ecm + ecm


if __name__ == "__main__":
    B, C, L = 2, 8, 128  # small shapes consistent with the module (NCL conv1d input)
    key = jax.random.PRNGKey(0)
    k_y, k_w1, k_w3, k_we = jax.random.split(key, 4)

    Y = jax.random.normal(k_y, (B, C, L), dtype=jnp.float32)

    # Deterministic parameter init (shapes as in the module's __init__):
    w1 = jax.random.normal(k_w1, (1, C, 1), dtype=jnp.float32) * 0.1   # eam_conv1x1
    w3 = jax.random.normal(k_w3, (C, C, 3), dtype=jnp.float32) * 0.1   # eam_conv3x3
    k_ecam = _ecam_kernel_size(C)                                       # ECAM conv1d kernel size
    w_ecam = jax.random.normal(k_we, (k_ecam,), dtype=jnp.float32) * 0.1

    out = jax.block_until_ready(jam_forward(Y, w1, w3, w_ecam))
    ref = jax.block_until_ready(jam_reference(Y, w1, w3, w_ecam))
    assert out.shape == (B, C, L)
    assert jnp.allclose(out, ref, atol=1e-5, rtol=1e-5), "mismatch vs reference"

    print("KERNEL_OK")
</pallas_src>

<mosaic_0001>
module attributes {stable_mosaic.version = 11 : i64} {
  func.func @kernel(%arg0: i32, %arg1: memref<1x8x128xf32, #tpu.memory_space<vmem>>, %arg2: memref<3x9x8xf32, #tpu.memory_space<vmem>>, %arg3: memref<3x1xf32, #tpu.memory_space<vmem>>, %arg4: memref<1x8x128xf32, #tpu.memory_space<vmem>>) attributes {dimension_semantics = [#tpu.dimension_semantics<parallel>], iteration_bounds = array<i64: 2>, scalar_prefetch = 0 : i64, scratch_operands = 0 : i64, tpu.core_type = #tpu.core_type<tc>, window_params = [{transform_indices = @transform_0, window_bounds = array<i64: 1, 8, 128>}, {pipeline_mode = #tpu.pipeline_mode<synchronous>, transform_indices = @transform_1, window_bounds = array<i64: 3, 9, 8>}, {pipeline_mode = #tpu.pipeline_mode<synchronous>, transform_indices = @transform_2, window_bounds = array<i64: 3, 1>}, {transform_indices = @transform_3, window_bounds = array<i64: 1, 8, 128>}]} {
    %0 = tpu.iota {dimensions = array<i32: 1>} : vector<8x128xi32>
    %c0_i32 = arith.constant 0 : i32
    %1 = vector.broadcast %c0_i32 : i32 to vector<8x128xi32>
    %2 = arith.cmpi eq, %0, %1 : vector<8x128xi32>
    %c127_i32 = arith.constant 127 : i32
    %3 = vector.broadcast %c127_i32 : i32 to vector<8x128xi32>
    %4 = arith.cmpi eq, %0, %3 : vector<8x128xi32>
    %cst = arith.constant 7.812500e-03 : f32
    %c0_i32_0 = arith.constant 0 : i32
    %5 = arith.index_cast %c0_i32_0 : i32 to index
    %c0 = arith.constant 0 : index
    %c0_1 = arith.constant 0 : index
    %6 = vector.load %arg1[%5, %c0, %c0_1] : memref<1x8x128xf32, #tpu.memory_space<vmem>>, vector<1x8x128xf32>
    %7 = vector.shape_cast %6 : vector<1x8x128xf32> to vector<8x128xf32>
    %c1_i32 = arith.constant 1 : i32
    %8 = tpu.dynamic_rotate %7 by %c1_i32 dim 1 : vector<8x128xf32>, i32 -> vector<8x128xf32>
    %cst_2 = arith.constant 0.000000e+00 : f32
    %9 = vector.broadcast %cst_2 : f32 to vector<8x128xf32>
    %10 = arith.select %2, %9, %8 : vector<8x128xi1>, vector<8x128xf32>
    %c127_i32_3 = arith.constant 127 : i32
    %11 = tpu.dynamic_rotate %7 by %c127_i32_3 dim 1 : vector<8x128xf32>, i32 -> vector<8x128xf32>
    %cst_4 = arith.constant 0.000000e+00 : f32
    %12 = vector.broadcast %cst_4 : f32 to vector<8x128xf32>
    %13 = arith.select %4, %12, %11 : vector<8x128xi1>, vector<8x128xf32>
    %c0_5 = arith.constant 0 : index
    %c0_6 = arith.constant 0 : index
    %c0_7 = arith.constant 0 : index
    %14 = vector.load %arg2[%c0_5, %c0_6, %c0_7] : memref<3x9x8xf32, #tpu.memory_space<vmem>>, vector<1x9x8xf32>
    %15 = vector.shape_cast %14 : vector<1x9x8xf32> to vector<9x8xf32>
    %cst_8 = arith.constant dense<0.000000e+00> : vector<9x128xf32>
    %16 = tpu.matmul %15, %10, %cst_8 {dimension_numbers = #tpu.dot_dimension_numbers<[1], [0], [0], [1], [0, 0, 1, 1], [], []>} : vector<9x8xf32>, vector<8x128xf32>, vector<9x128xf32> -> vector<9x128xf32>
    %c1 = arith.constant 1 : index
    %c0_9 = arith.constant 0 : index
    %c0_10 = arith.constant 0 : index
    %17 = vector.load %arg2[%c1, %c0_9, %c0_10] : memref<3x9x8xf32, #tpu.memory_space<vmem>>, vector<1x9x8xf32>
    %18 = vector.shape_cast %17 : vector<1x9x8xf32> to vector<9x8xf32>
    %cst_11 = arith.constant dense<0.000000e+00> : vector<9x128xf32>
    %19 = tpu.matmul %18, %7, %cst_11 {dimension_numbers = #tpu.dot_dimension_numbers<[1], [0], [0], [1], [0, 0, 1, 1], [], []>} : vector<9x8xf32>, vector<8x128xf32>, vector<9x128xf32> -> vector<9x128xf32>
    %20 = arith.addf %16, %19 : vector<9x128xf32>
    %c2 = arith.constant 2 : index
    %c0_12 = arith.constant 0 : index
    %c0_13 = arith.constant 0 : index
    %21 = vector.load %arg2[%c2, %c0_12, %c0_13] : memref<3x9x8xf32, #tpu.memory_space<vmem>>, vector<1x9x8xf32>
    %22 = vector.shape_cast %21 : vector<1x9x8xf32> to vector<9x8xf32>
    %cst_14 = arith.constant dense<0.000000e+00> : vector<9x128xf32>
    %23 = tpu.matmul %22, %13, %cst_14 {dimension_numbers = #tpu.dot_dimension_numbers<[1], [0], [0], [1], [0, 0, 1, 1], [], []>} : vector<9x8xf32>, vector<8x128xf32>, vector<9x128xf32> -> vector<9x128xf32>
    %24 = arith.addf %20, %23 : vector<9x128xf32>
    %25 = vector.extract_strided_slice %24 {offsets = [0, 0], sizes = [8, 128], strides = [1, 1]} : vector<9x128xf32> to vector<8x128xf32>
    %26 = vector.extract_strided_slice %24 {offsets = [8, 0], sizes = [1, 128], strides = [1, 1]} : vector<9x128xf32> to vector<1x128xf32>
    %cst_15 = arith.constant 0.000000e+00 : f32
    %27 = vector.broadcast %cst_15 : f32 to vector<1x128xf32>
    %28 = arith.subf %27, %26 : vector<1x128xf32>
    %29 = math.exp %28 : vector<1x128xf32>
    %cst_16 = arith.constant 1.000000e+00 : f32
    %30 = vector.broadcast %cst_16 : f32 to vector<1x128xf32>
    %31 = arith.addf %30, %29 : vector<1x128xf32>
    %cst_17 = arith.constant 1.000000e+00 : f32
    %32 = vector.broadcast %cst_17 : f32 to vector<1x128xf32>
    %33 = arith.divf %32, %31 : vector<1x128xf32>
    %cst_18 = arith.constant 0.000000e+00 : f32
    %34 = vector.broadcast %cst_18 : f32 to vector<8x128xf32>
    %35 = arith.cmpf oge, %25, %34 : vector<8x128xf32>
    %cst_19 = arith.constant 0.00999999977 : f32
    %36 = vector.broadcast %cst_19 : f32 to vector<8x128xf32>
    %37 = arith.mulf %36, %25 : vector<8x128xf32>
    %38 = arith.select %35, %25, %37 : vector<8x128xi1>, vector<8x128xf32>
    %39 = vector.broadcast %33 : vector<1x128xf32> to vector<8x128xf32>
    %40 = arith.mulf %39, %38 : vector<8x128xf32>
    %41 = arith.addf %40, %7 : vector<8x128xf32>
    %cst_20 = arith.constant dense<0.000000e+00> : vector<8xf32>
    %42 = vector.multi_reduction <add>, %41, %cst_20 [1] : vector<8x128xf32> to vector<8xf32>
    %43 = vector.shape_cast %42 : vector<8xf32> to vector<8x1xf32>
    %44 = vector.broadcast %cst : f32 to vector<8x1xf32>
    %45 = arith.mulf %43, %44 : vector<8x1xf32>
    %cst_21 = arith.constant 0.000000e+00 : f32
    %46 = vector.broadcast %cst_21 : f32 to vector<1x1xf32>
    %47 = tpu.concatenate %46, %45, %46 in 0 : vector<1x1xf32>, vector<8x1xf32>, vector<1x1xf32> -> vector<10x1xf32>
    %cst_22 = arith.constant 0.000000e+00 : f32
    %48 = vector.broadcast %cst_22 : f32 to vector<8x1xf32>
    %c0_23 = arith.constant 0 : index
    %c0_24 = arith.constant 0 : index
    %49 = vector.load %arg3[%c0_23, %c0_24] : memref<3x1xf32, #tpu.memory_space<vmem>>, vector<1x1xf32>
    %50 = vector.extract_strided_slice %47 {offsets = [0, 0], sizes = [8, 1], strides = [1, 1]} : vector<10x1xf32> to vector<8x1xf32>
    %51 = vector.broadcast %49 : vector<1x1xf32> to vector<8x1xf32>
    %52 = arith.mulf %51, %50 : vector<8x1xf32>
    %53 = arith.addf %48, %52 : vector<8x1xf32>
    %c1_25 = arith.constant 1 : index
    %c0_26 = arith.constant 0 : index
    %54 = vector.load %arg3[%c1_25, %c0_26] : memref<3x1xf32, #tpu.memory_space<vmem>>, vector<1x1xf32>
    %55 = vector.extract_strided_slice %47 {offsets = [1, 0], sizes = [8, 1], strides = [1, 1]} : vector<10x1xf32> to vector<8x1xf32>
    %56 = vector.broadcast %54 : vector<1x1xf32> to vector<8x1xf32>
    %57 = arith.mulf %56, %55 : vector<8x1xf32>
    %58 = arith.addf %53, %57 : vector<8x1xf32>
    %c2_27 = arith.constant 2 : index
    %c0_28 = arith.constant 0 : index
    %59 = vector.load %arg3[%c2_27, %c0_28] : memref<3x1xf32, #tpu.memory_space<vmem>>, vector<1x1xf32>
    %60 = vector.extract_strided_slice %47 {offsets = [2, 0], sizes = [8, 1], strides = [1, 1]} : vector<10x1xf32> to vector<8x1xf32>
    %61 = vector.broadcast %59 : vector<1x1xf32> to vector<8x1xf32>
    %62 = arith.mulf %61, %60 : vector<8x1xf32>
    %63 = arith.addf %58, %62 : vector<8x1xf32>
    %cst_29 = arith.constant 0.000000e+00 : f32
    %64 = vector.broadcast %cst_29 : f32 to vector<8x1xf32>
    %65 = arith.subf %64, %63 : vector<8x1xf32>
    %66 = math.exp %65 : vector<8x1xf32>
    %cst_30 = arith.constant 1.000000e+00 : f32
    %67 = vector.broadcast %cst_30 : f32 to vector<8x1xf32>
    %68 = arith.addf %67, %66 : vector<8x1xf32>
    %cst_31 = arith.constant 1.000000e+00 : f32
    %69 = vector.broadcast %cst_31 : f32 to vector<8x1xf32>
    %70 = arith.divf %69, %68 : vector<8x1xf32>
    %cst_32 = arith.constant 1.000000e+00 : f32
    %71 = vector.broadcast %cst_32 : f32 to vector<8x1xf32>
    %72 = arith.addf %70, %71 : vector<8x1xf32>
    %73 = vector.broadcast %72 : vector<8x1xf32> to vector<8x128xf32>
    %74 = arith.mulf %73, %41 : vector<8x128xf32>
    %75 = arith.index_cast %c0_i32_0 : i32 to index
    %c0_33 = arith.constant 0 : index
    %c0_34 = arith.constant 0 : index
    %76 = vector.load %arg4[%75, %c0_33, %c0_34] : memref<1x8x128xf32, #tpu.memory_space<vmem>>, vector<1x8x128xf32>
    %77 = vector.shape_cast %76 : vector<1x8x128xf32> to vector<8x128xf32>
    %78 = vector.shape_cast %74 : vector<8x128xf32> to vector<1x8x128xf32>
    tpu.vector_store %arg4[%75, %c0_33, %c0_34], %78 {strides = array<i32>} : memref<1x8x128xf32, #tpu.memory_space<vmem>>, vector<1x8x128xf32>,
    %c1_i32_35 = arith.constant 1 : i32
    return
  }
  func.func @transform_0(%arg0: i32) -> (i32, i32, i32) {
    %c0_i32 = arith.constant 0 : i32
    %c0_i32_0 = arith.constant 0 : i32
    %c0_i32_1 = arith.constant 0 : i32
    return %arg0, %c0_i32, %c0_i32_0 : i32, i32, i32
  }
  func.func @transform_1(%arg0: i32) -> (i32, i32, i32) {
    %c0_i32 = arith.constant 0 : i32
    %c0_i32_0 = arith.constant 0 : i32
    %c0_i32_1 = arith.constant 0 : i32
    %c0_i32_2 = arith.constant 0 : i32
    return %c0_i32, %c0_i32_0, %c0_i32_1 : i32, i32, i32
  }
  func.func @transform_2(%arg0: i32) -> (i32, i32) {
    %c0_i32 = arith.constant 0 : i32
    %c0_i32_0 = arith.constant 0 : i32
    %c0_i32_1 = arith.constant 0 : i32
    return %c0_i32, %c0_i32_0 : i32, i32
  }
  func.func @transform_3(%arg0: i32) -> (i32, i32, i32) {
    %c0_i32 = arith.constant 0 : i32
    %c0_i32_0 = arith.constant 0 : i32
    %c0_i32_1 = arith.constant 0 : i32
    return %arg0, %c0_i32, %c0_i32_0 : i32, i32, i32
  }
}

</mosaic_0001>

<llo_original>
// kernel: tpu_custom_call.1
$region0: #{tpu_custom_call.1}
  #allocation0 [shape = 'u32[]', space=smem, size = 0x4, offset = 0x4, fixed_abs, tag = 'smem constant byte address 0x4 - core index']
  #allocation1 [shape = 'u32[72,128]{1,0:T(1,128)}', space=vmem, size = 0x9000, scoped, tag = 'internal scratch']
  %s0 = inlined_call_operand.vmem [shape: f32[2,8,128], index: 0, kind: input, shape index: {}]
  %s1 = inlined_call_operand.vmem [shape: f32[3,9,8], index: 1, kind: input, shape index: {}]
  %s2 = inlined_call_operand.vmem [shape: f32[3,1], index: 2, kind: input, shape index: {}]
  %s3 = inlined_call_operand.hbm [shape: f32[2,8,128], index: 3, kind: output, shape index: {}]
  %s4 = sld [smem:[#allocation0]]
  $region45: #{tpu_custom_call.1} parent=0
    _
  %s6 = ssub.s32 1, %s4
  %s7 = scalar_select 0, %s6, %s4
  $region1: #{tpu_custom_call.1} parent=0
    #allocation2 [shape = 'u8[8192]{0}', space=vmem, size = 0x2000, scoped, tag = 'output window, operand 0']
    #allocation3 [shape = 's32[2]{0}', space=sflag, size = 0x8, scoped, tag = 'scoped memory for tpu_custom_call.1']
    %8 = vsyncpa [#allocation3], 0
    %s9 = scalar_lea.sflag [#allocation3], 1
    %10 = vsyncpa %s9, 0
    loop: start=0, step=1, limit=4
    $region2: #{tpu_custom_call.1} parent=1 // loop_pre_header
      _
    $region3: #{tpu_custom_call.1} parent=1 // loop_header
      %s12 = sphi 0, %s16
      %p13 = scmp.ge.s32.totalorder %s12, 4
      %s22 = sphi 0, %s24
      %s25 = sphi 0, %s22
      %s26 = sphi 0, %s25
      %s42 = sphi 0, %s26
      %s46 = sphi 0, %s46
      %s48 = sphi 0, %s46
      %s49 = sphi 0, %s48
      %s63 = sphi 0, %s49
      %s67 = sphi 0, %s67
      %s69 = sphi 0, %s67
      %s70 = sphi 0, %s69
      %s84 = sphi 0, %s70
      %s90 = sphi 0, %s92
      %s93 = sphi 0, %s90
      %s94 = sphi 0, %s93
      %s110 = sphi 0, %s94
    $region4: #{tpu_custom_call.1} parent=1 // loop_header_branch
      %15 = sbr.rel (%p13) target = $region8
    $region5: #{tpu_custom_call.1} parent=1 // loop_body
      %s17 = ssub.s32 %s12, 1
      %s18 = ssub.s32 %s12, 2
      %s19 = sadd.s32 %s12, 1
      %s20 = ssub.s32 %s12, %s19
      %p21 = scmp.eq.s32.totalorder %s20, 0
      %s23 = sadd.s32 %s22, 1
      %s24 = scalar_select %p21, %s22, %s23
      %p27 = pneg %p21
      %p28 = scmp.eq.s32.totalorder %s12, 1
      %p29 = por %p27, %p28
      %p30 = scmp.ne.s32.totalorder %s22, %s25
      %p31 = scmp.eq.s32.totalorder %s12, 0
      %p32 = por %p30, %p31
      %p33 = scmp.ne.s32.totalorder %s22, %s25
      %p34 = scmp.eq.s32.totalorder %s17, 1
      %p35 = por %p33, %p34
      %p36 = scmp.ne.s32.totalorder %s25, %s26
      %p37 = scmp.eq.s32.totalorder %s17, 0
      %p38 = por %p36, %p37
      %p39 = scmp.ne.s32.totalorder %s25, %s26
      %p40 = scmp.eq.s32.totalorder %s18, 1
      %p41 = por %p39, %p40
      %p43 = scmp.ne.s32.totalorder %s26, %s42
      %p44 = scmp.eq.s32.totalorder %s18, 0
      %p45 = por %p43, %p44
      %s47 = sadd.s32 %s46, 1
      %p50 = scmp.eq.s32.totalorder %s12, 1
      %p51 = scmp.ne.s32.totalorder %s46, %s48
      %p52 = scmp.eq.s32.totalorder %s12, 0
      %p53 = por %p51, %p52
      %p54 = scmp.ne.s32.totalorder %s46, %s48
      %p55 = scmp.eq.s32.totalorder %s17, 1
      %p56 = por %p54, %p55
      %p57 = scmp.ne.s32.totalorder %s48, %s49
      %p58 = scmp.eq.s32.totalorder %s17, 0
      %p59 = por %p57, %p58
      %p60 = scmp.ne.s32.totalorder %s48, %s49
      %p61 = scmp.eq.s32.totalorder %s18, 1
      %p62 = por %p60, %p61
      %p64 = scmp.ne.s32.totalorder %s49, %s63
      %p65 = scmp.eq.s32.totalorder %s18, 0
      %p66 = por %p64, %p65
      %s68 = sadd.s32 %s67, 1
      %p71 = scmp.eq.s32.totalorder %s12, 1
      %p72 = scmp.ne.s32.totalorder %s67, %s69
      %p73 = scmp.eq.s32.totalorder %s12, 0
      %p74 = por %p72, %p73
      %p75 = scmp.ne.s32.totalorder %s67, %s69
      %p76 = scmp.eq.s32.totalorder %s17, 1
      %p77 = por %p75, %p76
      %p78 = scmp.ne.s32.totalorder %s69, %s70
      %p79 = scmp.eq.s32.totalorder %s17, 0
      %p80 = por %p78, %p79
      %p81 = scmp.ne.s32.totalorder %s69, %s70
      %p82 = scmp.eq.s32.totalorder %s18, 1
      %p83 = por %p81, %p82
      %p85 = scmp.ne.s32.totalorder %s70, %s84
      %p86 = scmp.eq.s32.totalorder %s18, 0
      %p87 = por %p85, %p86
      %s88 = ssub.s32 %s12, %s19
      %p89 = scmp.eq.s32.totalorder %s88, 0
      %s91 = sadd.s32 %s90, 1
      %s92 = scalar_select %p89, %s90, %s91
      %p95 = pneg %p89
      %p96 = scmp.eq.s32.totalorder %s12, 1
      %p97 = por %p95, %p96
      %p98 = scmp.ne.s32.totalorder %s90, %s93
      %p99 = scmp.eq.s32.totalorder %s12, 0
      %p100 = por %p98, %p99
      %p101 = scmp.ne.s32.totalorder %s90, %s93
      %p102 = scmp.eq.s32.totalorder %s17, 1
      %p103 = por %p101, %p102
      %p104 = scmp.ne.s32.totalorder %s93, %s94
      %p105 = scmp.eq.s32.totalorder %s17, 0
      %p106 = por %p104, %p105
      %p107 = scmp.ne.s32.totalorder %s93, %s94
      %p108 = scmp.eq.s32.totalorder %s18, 1
      %p109 = por %p107, %p108
      %p111 = scmp.ne.s32.totalorder %s94, %s110
      %p112 = scmp.eq.s32.totalorder %s18, 0
      %p113 = por %p111, %p112
      %p114 = scmp.le.s32.totalorder 1, %s12
      %p115 = scmp.lt.s32.totalorder %s12, 3
      %p116 = pnand %p114, %p115
      %p117 = pneg %p116
      // Predicated region
      $region9: #{tpu_custom_call.1} parent=5 // pred_check
        _
      $region10: #{tpu_custom_call.1} parent=5 // pred_check_branch
        %119 = sbr.rel (%p116) target = $region12
      $region11: #{tpu_custom_call.1} parent=5 // pred_region
        %s120 = ssub.s32 %s12, 1
        // Predicated region
        $region13: #{tpu_custom_call.1} parent=11 // pred_check
          %p121 = pneg %p59
        $region14: #{tpu_custom_call.1} parent=11 // pred_check_branch
          %123 = sbr.rel (%p121) target = $region16
        $region15: #{tpu_custom_call.1} parent=11 // pred_region
          _
        $region16: #{tpu_custom_call.1} parent=11 // pred_fallthru
          _
        // Predicated region
        $region17: #{tpu_custom_call.1} parent=11 // pred_check
          %p124 = pneg %p80
        $region18: #{tpu_custom_call.1} parent=11 // pred_check_branch
          %126 = sbr.rel (%p124) target = $region20
        $region19: #{tpu_custom_call.1} parent=11 // pred_region
          _
        $region20: #{tpu_custom_call.1} parent=11 // pred_fallthru
          _
      $region12: #{tpu_custom_call.1} parent=5 // pred_fallthru
        _
      %p127 = scmp.lt.s32.totalorder %s12, 2
      // Predicated region
      $region21: #{tpu_custom_call.1} parent=5 // pred_check
        %p128 = pneg %p127
      $region22: #{tpu_custom_call.1} parent=5 // pred_check_branch
        %130 = sbr.rel (%p128) target = $region24
      $region23: #{tpu_custom_call.1} parent=5 // pred_region
        // Predicated region
        $region25: #{tpu_custom_call.1} parent=23 // pred_check
          %p131 = pneg %p32
        $region26: #{tpu_custom_call.1} parent=23 // pred_check_branch
          %133 = sbr.rel (%p131) target = $region28
        $region27: #{tpu_custom_call.1} parent=23 // pred_region
          %p134 = scmp.lt.s32.totalorder %s12, 1
          %s135 = scalar_select %p134, %s12, 1
          %s136 = smul.addr %s135, 8
          %s137 = scalar_lea.vmem %s0, %s136
        $region28: #{tpu_custom_call.1} parent=23 // pred_fallthru
          _
      $region24: #{tpu_custom_call.1} parent=5 // pred_fallthru
        _
      %p138 = scmp.le.s32.totalorder 1, %s12
      %p139 = scmp.lt.s32.totalorder %s12, 3
      %p140 = pnand %p138, %p139
      %p141 = pneg %p140
      // Predicated region
      $region29: #{tpu_custom_call.1} parent=5 // pred_check
        _
      $region30: #{tpu_custom_call.1} parent=5 // pred_check_branch
        %143 = sbr.rel (%p140) target = $region32
      $region31: #{tpu_custom_call.1} parent=5 // pred_region
        %s144 = ssub.s32 %s12, 1
        %p145 = scmp.lt.s32.totalorder %s17, 1
        %s146 = scalar_select %p145, %s17, 1
        %s147 = smul.addr %s146, 8
        %s148 = scalar_lea.vmem %s0, %s147
        %p149 = pneg %p38
        %p150 = pneg %p35
        %p151 = pneg %p59
        %p152 = pneg %p56
        %p153 = pneg %p80
        %p154 = pneg %p77
        %p155 = pneg %p106
        %p156 = pneg %p103
        %s157 = sand.u32 %s93, 1
        %s158 = scalar_lea.sflag [#allocation3], %s157
        %s159 = sand.u32 %s93, 1
        %s160 = smul.addr %s159, 8
        %s161 = scalar_lea.vmem [#allocation2], %s160
        %p162 = scmp.lt.s32.totalorder %s17, 1
        %s163 = scalar_select %p162, %s17, 1
        %s164 = smul.addr %s163, 8
        %s165 = scalar_lea.vmem %s0, %s164
        %v166 = vlaneseq
        %v167 = vand.u32 %v166, 127
        %vm168 = vcmp.eq.s32.totalorder %v167, 0
        %vm169 = vcmp.eq.s32.totalorder %v167, 127
        %v170 = vld [vmem:[%s165] sm:$0xff]
        %171 = vrot.lane.b32.xlu0 %v170, 1
        %v172 = vpop.permute.xlu0 %171
        %v173 = vsel %vm168, 0.0, %v172
        %174 = vrot.lane.b32.xlu0 %v170, 127
        %v175 = vpop.permute.xlu0 %174
        %v176 = vsel %vm169, 0.0, %v175
        %v177 = vld [vmem:[%s1] sm:$0xff]
        %v178 = vld [vmem:[%s1 + $0x8] sm:$0x1]
        %s179 = scalar_lea.vmem %s1, 16
        %v180 = vld [vmem:[%s179] sm:$0xff]
        %v181 = vld [vmem:[%s179 + $0x8] sm:$0x1]
        %vm182 = vcmask 64512
        %v184 = vsel %vm182, %v180, 0
        %v187 = vsel %vm182, %v181, 0
        %189 = vmatpush.msra.mxu0 0.0
        %190 = vmatpush.msra.mxu0 0.0
        %191 = vmatpush.msra.mxu0 0.0
        %192 = vmatpush.msra.mxu0 0.0
        %193 = vmatpush.msra.mxu0 0.0
        %194 = vmatpush.msra.mxu0 0.0
        %195 = vmatpush.msra.mxu0 0.0
        %196 = vmatpush.msra.mxu0 0.0
        %197 = vmatpush.msra.mxu0 0.0
        %198 = vmatpush.msra.mxu0 0.0
        %199 = vmatpush.msra.mxu0 0.0
        %200 = vmatpush.msra.mxu0 0.0
        %201 = vmatpush.msra.mxu0 0.0
        %202 = vmatpush.msra.mxu0 0.0
        %203 = vmatpush.msra.mxu0 0.0
        %204 = vmatpush.msra.mxu0 %v170
        %205 = vmatmul.f32.gmra.mxu0 %v184
        %v206 = vpop.f32.mrf.mxu0
        %v207 = vadd.f32 0.0, %v206
        %208 = vmatmul.f32.gmra.mxu0 %v187
        %v209 = vpop.f32.mrf.mxu0
        %v210 = vadd.f32 0.0, %v209
        %211 = vdwg.mxu0
        %v213 = vsel %vm182, %v177, 0
        %v216 = vsel %vm182, %v178, 0
        %218 = vmatpush.msra.mxu0 0.0
        %219 = vmatpush.msra.mxu0 0.0
        %220 = vmatpush.msra.mxu0 0.0
        %221 = vmatpush.msra.mxu0 0.0
        %222 = vmatpush.msra.mxu0 0.0
        %223 = vmatpush.msra.mxu0 0.0
        %224 = vmatpush.msra.mxu0 0.0
        %225 = vmatpush.msra.mxu0 0.0
        %226 = vmatpush.msra.mxu0 0.0
        %227 = vmatpush.msra.mxu0 0.0
        %228 = vmatpush.msra.mxu0 0.0
        %229 = vmatpush.msra.mxu0 0.0
        %230 = vmatpush.msra.mxu0 0.0
        %231 = vmatpush.msra.mxu0 0.0
        %232 = vmatpush.msra.mxu0 0.0
        %233 = vmatpush.msra.mxu0 %v173
        %234 = vmatmul.f32.gmra.mxu0 %v213
        %v235 = vpop.f32.mrf.mxu0
        %v236 = vadd.f32 %v207, %v235
        %237 = vmatmul.f32.gmra.mxu0 %v216
        %v238 = vpop.f32.mrf.mxu0
        %v239 = vadd.f32 %v210, %v238
        %240 = vdwg.mxu0
        %s241 = scalar_lea.vmem %s1, 32
        %v242 = vld [vmem:[%s241] sm:$0xff]
        %v243 = vld [vmem:[%s241 + $0x8] sm:$0x1]
        %v245 = vsel %vm182, %v242, 0
        %v248 = vsel %vm182, %v243, 0
        %250 = vmatpush.msra.mxu0 0.0
        %251 = vmatpush.msra.mxu0 0.0
        %252 = vmatpush.msra.mxu0 0.0
        %253 = vmatpush.msra.mxu0 0.0
        %254 = vmatpush.msra.mxu0 0.0
        %255 = vmatpush.msra.mxu0 0.0
        %256 = vmatpush.msra.mxu0 0.0
        %257 = vmatpush.msra.mxu0 0.0
        %258 = vmatpush.msra.mxu0 0.0
        %259 = vmatpush.msra.mxu0 0.0
        %260 = vmatpush.msra.mxu0 0.0
        %261 = vmatpush.msra.mxu0 0.0
        %262 = vmatpush.msra.mxu0 0.0
        %263 = vmatpush.msra.mxu0 0.0
        %264 = vmatpush.msra.mxu0 0.0
        %265 = vmatpush.msra.mxu0 %v176
        %266 = vmatmul.f32.gmra.mxu0 %v245
        %v267 = vpop.f32.mrf.mxu0
        %v268 = vadd.f32 0.0, %v267
        %269 = vmatmul.f32.gmra.mxu0 %v248
        %v270 = vpop.f32.mrf.mxu0
        %v271 = vadd.f32 0.0, %v270
        %272 = vdwg.mxu0
        %v273 = vadd.f32 %v236, %v268
        %v274 = vadd.f32 %v239, %v271
        %v275 = vsub.f32 0.0, %v274
        %v276 = vmul.f32 %v275, 1.442695
        %v277 = vpow.pop %v276
        %v278 = vadd.f32 %v277, 1.0
        %v279 = vrcp.pop %v278
        %v280 = vmul.f32 %v278, %v279
        %v281 = vsub.f32 1.0, %v280
        %v282 = vmul.f32 %v279, %v281
        %v283 = vadd.f32 %v279, %v282
        %vm284 = vweird.f32 %v278
        %vm285 = vweird.f32 %v279
        %vm286 = vmor %vm284, %vm285
        %v287 = vsel %vm286, %v279, %v283
        %v288 = vand.u32 2147483647, %v278
        %vm289 = vcmp.eq.f32.partialorder %v288, 8.507059e+37
        %v290 = vand.u32 %v278, 2147483648
        %v291 = vor.u32 1.1754944e-38, %v290
        %v292 = vsel %vm289, %v291, %v287
        %v293 = vmul.f32 1.0, %v292
        %vm294 = vcmp.ge.f32.partialorder %v273, 0.0
        %v295 = vmul.f32 %v273, 0.01
        %v296 = vsel %vm294, %v273, %v295
        %v297 = vperm.slane %v293, 0
        %v298 = vmul.f32 %v297, %v296
        %v299 = vadd.f32 %v298, %v170
        %300 = vadd.xlane.f32.xlu0 %v299
        %v301 = vpop.xlane.xlu0 %300
        %v302 = vmul.f32 %v301, 0.0078125
        %v304 = vrot.slane %v302, 7
        %vm306 = vcmask 1040384
        %v307 = vsel %vm306, 0.0, %v304
        %v308 = vsel %vm306, %v304, 0.0
        %v309 = vld [vmem:[%s2] sm:$0x1]
        %v310 = vperm.slane %v309, 0
        %v311 = vmul.f32 %v310, %v307
        %v312 = vadd.f32 %v311, 0.0
        %v313 = vld [vmem:[%s2 + $0x1] sm:$0x1]
        %v314 = vperm.slane %v313, 0
        %v315 = vmul.f32 %v314, %v307
        %v316 = vmul.f32 %v314, %v308
        %vm319 = vcmask 1046528
        %v320 = vrot.slane %v315, 1
        %v321 = vrot.slane %v316, 1
        %v322 = vsel %vm319, %v320, %v321
        %v324 = vadd.f32 %v312, %v322
        %v325 = vld [vmem:[%s2 + $0x2] sm:$0x1]
        %v326 = vperm.slane %v325, 0
        %v327 = vmul.f32 %v326, %v307
        %v328 = vmul.f32 %v326, %v308
        %vm331 = vcmask 1045504
        %v332 = vrot.slane %v327, 2
        %v333 = vrot.slane %v328, 2
        %v334 = vsel %vm331, %v332, %v333
        %v336 = vadd.f32 %v324, %v334
        %v337 = vsub.f32 0.0, %v336
        %v338 = vmul.f32 %v337, 1.442695
        %v339 = vpow.pop %v338
        %v340 = vadd.f32 %v339, 1.0
        %v341 = vrcp.pop %v340
        %v342 = vmul.f32 %v340, %v341
        %v343 = vsub.f32 1.0, %v342
        %v344 = vmul.f32 %v341, %v343
        %v345 = vadd.f32 %v341, %v344
        %vm346 = vweird.f32 %v340
        %vm347 = vweird.f32 %v341
        %vm348 = vmor %vm346, %vm347
        %v349 = vsel %vm348, %v341, %v345
        %v350 = vand.u32 2147483647, %v340
        %vm351 = vcmp.eq.f32.partialorder %v350, 8.507059e+37
        %v352 = vand.u32 %v340, 2147483648
        %v353 = vor.u32 1.1754944e-38, %v352
        %v354 = vsel %vm351, %v353, %v349
        %v355 = vmul.f32 1.0, %v354
        %v356 = vadd.f32 %v355, 1.0
        %358 = vset.pattern.permute.xlu0 0
        %359 = vperm.xlu0 %358, %v356
        %v360 = vpop.permute.xlu0 %359
        %v362 = vmul.f32 %v360, %v299
        %363 = vst [vmem:[%s161] sm:$0xff] %v362
        %s364 = sand.u32 %s93, 1
        %s365 = scalar_lea.sflag [#allocation3], %s364
        %s366 = sand.u32 %s93, 1
        %s367 = smul.addr %s366, 8
        %s368 = scalar_lea.vmem [#allocation2], %s367
        // Predicated region
        $region33: #{tpu_custom_call.1} parent=31 // pred_check
          %p369 = pneg %p103
        $region34: #{tpu_custom_call.1} parent=31 // pred_check_branch
          %371 = sbr.rel (%p369) target = $region36
        $region35: #{tpu_custom_call.1} parent=31 // pred_region
          %373 = vsyncadd %s365, 0
          %s374 = smul.addr %s17, 8
          %s375 = scalar_lea.hbm %s3, %s374
          %s377 = sshll.u32 %s368, 4
          %s378 = int_to_ptr.vmem [resolvable:$true] %s377
          %s379 = sshll.u32 %s375, 4
          %s380 = int_to_ptr.hbm [resolvable:$true] %s379
          %382 = dma.vmem_to_hbm [thread:$0]  %s378, 128, %s380, %s365
        $region36: #{tpu_custom_call.1} parent=31 // pred_fallthru
          _
      $region32: #{tpu_custom_call.1} parent=5 // pred_fallthru
        _
      %p383 = scmp.le.s32.totalorder 2, %s12
      // Predicated region
      $region37: #{tpu_custom_call.1} parent=5 // pred_check
        %p384 = pneg %p383
      $region38: #{tpu_custom_call.1} parent=5 // pred_check_branch
        %386 = sbr.rel (%p384) target = $region40
      $region39: #{tpu_custom_call.1} parent=5 // pred_region
        %s387 = ssub.s32 %s12, 2
        // Predicated region
        $region41: #{tpu_custom_call.1} parent=39 // pred_check
          %p388 = pneg %p109
        $region42: #{tpu_custom_call.1} parent=39 // pred_check_branch
          %390 = sbr.rel (%p388) target = $region44
        $region43: #{tpu_custom_call.1} parent=39 // pred_region
          %s391 = sand.u32 %s94, 1
          %s392 = scalar_lea.sflag [#allocation3], %s391
          %s393 = sand.u32 %s94, 1
          %s394 = smul.addr %s393, 8
          %s395 = scalar_lea.vmem [#allocation2], %s394
          %397 = dma.done %s392, 128
        $region44: #{tpu_custom_call.1} parent=39 // pred_fallthru
          _
      $region40: #{tpu_custom_call.1} parent=5 // pred_fallthru
        _
    $region6: #{tpu_custom_call.1} parent=1 // loop_footer
      %s16 = sadd.s32 1, %s12
    $region7: #{tpu_custom_call.1} parent=1 // loop_footer_branch
      %11 = sbr.rel target = $region3
    $region8: #{tpu_custom_call.1} parent=1 // loop_exit
      _
    %398 = vsyncpa [#allocation3], 1
    %s399 = scalar_lea.sflag [#allocation3], 1
    %400 = vsyncpa %s399, 1

</llo_original>
